<compile_context>
chip_gen: v7x
topology: tpu7x:2x2x1
jax: 0.10.0
libtpu: 0.0.40
codegen_flags: <defaults>
</compile_context>

<pallas_src>
import jax
import jax.numpy as jnp
from jax.experimental import pallas as pl
from jax.experimental.pallas import tpu as pltpu


# ----------------------------- Pallas kernel -------------------------------

def policy_head_kernel(x_ref, wbig_ref, shift_ref, wfc_ref, bfc_ref, o_ref):
    # x_ref:     (TB, 9*C)   bf16, rows = batch, cols = c*9 + hw (NCHW flatten)
    # wbig_ref:  (9*C, 9*2C) bf16, block-diagonal conv weight, BN scale folded
    # shift_ref: (1, 9*2C)   f32,  folded BN shift, index o*9 + hw
    # wfc_ref:   (9*2C, 9)   bf16, fc_w.T (no permutation needed)
    # bfc_ref:   (1, 9)      f32,  FC bias
    # o_ref:     (TB, 9)     f32,  softmax probabilities
    h = jnp.dot(x_ref[...], wbig_ref[...], preferred_element_type=jnp.float32)
    h = jnp.maximum(h + shift_ref[...], 0.0)                   # BN shift + ReLU (f32)
    logits = jnp.dot(h.astype(jnp.bfloat16), wfc_ref[...],
                     preferred_element_type=jnp.float32) + bfc_ref[...]
    m = jnp.max(logits, axis=-1, keepdims=True)
    e = jnp.exp(logits - m)
    denom = jnp.sum(e, axis=-1, keepdims=True)
    o_ref[...] = e / denom                                      # exact normalization


# ------------------------- one-time parameter folding ------------------------

def prepare_policy_head_params(params, eps=1e-5):
    """Fold conv bias + eval-mode BN into the conv weight; build the block-
    diagonal (channel-major) conv matrix and the FC weight once, offline."""
    conv_w = params["conv_w"].astype(jnp.float32)
    C2, C = conv_w.shape[0], conv_w.shape[1]
    HW = 9

    scale = params["bn_gamma"] * jax.lax.rsqrt(params["bn_var"] + eps)       # (2C,)
    w_fold = (conv_w.reshape(C2, C) * scale[:, None]).T                       # (C, 2C)
    shift = (params["conv_b"] - params["bn_mean"]) * scale + params["bn_beta"]

    # Block-diagonal conv weight in CHANNEL-MAJOR order on both sides:
    #   w_big[c*9+hw, o*9+hw'] = w_fold[c, o] * (hw == hw')
    # so the kernel input is just x.reshape(B, C*9) (zero-cost NCHW flatten)
    # and the activation columns (o*9+hw) match PyTorch's flatten exactly.
    eye_hw = jnp.eye(HW, dtype=jnp.float32)
    w_big = (w_fold[:, None, :, None] *
             eye_hw[None, :, None, :]).reshape(C * HW, C2 * HW)               # (9C, 18C)
    shift_big = jnp.repeat(shift, HW).reshape(1, C2 * HW)                     # (1, 18C)

    return {
        "w_big": w_big.astype(jnp.bfloat16),
        "shift": shift_big.astype(jnp.float32),
        "w_fc": params["fc_w"].T.astype(jnp.bfloat16),                        # (18C, 9)
        "b_fc": params["fc_b"].reshape(1, HW).astype(jnp.float32),
    }


# ------------------------------ JAX wrapper ---------------------------------

def _choose_batch_tile(B):
    # Small B: one full-extent block (no padding, no extra grid steps).
    # Large B: big tiles (amortize ~0.35us/grid step; per-block VMEM is KB-scale
    # so even v7x's 64 MiB is a non-issue) but >= 2 tiles so both v7x
    # TensorCores get work from the "parallel" grid axis.
    if B <= 128:
        return B, 1
    tb = min(1024, ((B + 1) // 2 + 127) // 128 * 128)   # multiple of 128
    n = -(-B // tb)
    return tb, n


@jax.jit
def policy_head_forward(x, folded):
    """x: (B, C, 3, 3) float32 NCHW.  Returns (B, 3, 3) softmax probs."""
    B, C, H, W = x.shape
    assert (H, W) == (3, 3)
    HW = H * W                    # 9
    HWC = C * HW                  # 9*C
    HWC2 = 2 * C * HW             # 9*2C

    # NCHW flatten is already channel-major (c*9+hw): zero-copy reshape,
    # no transpose of the input.  bf16 for the MXU / activation stream.
    x_mat = x.reshape(B, HWC).astype(jnp.bfloat16)

    tb, n_tiles = _choose_batch_tile(B)
    B_pad = tb * n_tiles
    if B_pad != B:
        # TODO(synk): could use an implicit ragged last block instead of a pad
        # copy; explicit zero-pad kept as the safe baseline for the tail.
        x_mat = jnp.pad(x_mat, ((0, B_pad - B), (0, 0)))

    flops = 2 * B_pad * (HWC * HWC2 + HWC2 * HW)
    bytes_accessed = (B_pad * HWC * 2 + B_pad * HW * 4            # x in, probs out
                      + HWC * HWC2 * 2 + HWC2 * 4                 # conv weight, shift
                      + HWC2 * HW * 2 + HW * 4)                   # fc weight, bias

    probs = pl.pallas_call(
        policy_head_kernel,
        out_shape=jax.ShapeDtypeStruct((B_pad, HW), jnp.float32),
        grid_spec=pltpu.PrefetchScalarGridSpec(
            num_scalar_prefetch=0,
            grid=(n_tiles,),
            in_specs=[
                pl.BlockSpec((tb, HWC),   lambda i: (i, 0)),   # activations (tiled on batch)
                pl.BlockSpec((HWC, HWC2), lambda i: (0, 0)),   # conv weight (resident)
                pl.BlockSpec((1, HWC2),   lambda i: (0, 0)),   # BN shift    (resident)
                pl.BlockSpec((HWC2, HW),  lambda i: (0, 0)),   # FC weight   (resident)
                pl.BlockSpec((1, HW),     lambda i: (0, 0)),   # FC bias     (resident)
            ],
            out_specs=pl.BlockSpec((tb, HW), lambda i: (i, 0)),
        ),
        compiler_params=pltpu.CompilerParams(
            dimension_semantics=("parallel",)),
        cost_estimate=pl.CostEstimate(flops=flops,
                                      transcendentals=B_pad * HW,
                                      bytes_accessed=bytes_accessed),
    )(x_mat, folded["w_big"], folded["shift"], folded["w_fc"], folded["b_fc"])

    return probs[:B].reshape(B, 3, 3)


# ------------------------- pure-JAX reference check -------------------------

def policy_head_reference(x, params, eps=1e-5):
    B, C, H, W = x.shape
    C2 = 2 * C
    conv = jnp.einsum("bchw,oc->bohw", x, params["conv_w"].reshape(C2, C))
    conv = conv + params["conv_b"][None, :, None, None]
    scale = params["bn_gamma"] / jnp.sqrt(params["bn_var"] + eps)
    bn = (conv - params["bn_mean"][None, :, None, None]) * \
        scale[None, :, None, None] + params["bn_beta"][None, :, None, None]
    r = jnp.maximum(bn, 0.0)
    flat = r.reshape(B, C2 * H * W)                 # channel-major (c*9 + hw)
    logits = flat @ params["fc_w"].T + params["fc_b"]
    return jax.nn.softmax(logits, axis=1).reshape(B, 3, 3)


# ---------------------------------- main -------------------------------------

if __name__ == "__main__":
    B, C = 2, 4          # batch=2, num_channels=4 -> input (2, 4, 3, 3)
    C2 = 2 * C
    key = jax.random.PRNGKey(0)
    ks = jax.random.split(key, 9)

    params = {
        "conv_w":   0.1 * jax.random.normal(ks[0], (C2, C, 1, 1), jnp.float32),
        "conv_b":   0.1 * jax.random.normal(ks[1], (C2,), jnp.float32),
        "bn_gamma": 1.0 + 0.1 * jax.random.normal(ks[2], (C2,), jnp.float32),
        "bn_beta":  0.1 * jax.random.normal(ks[3], (C2,), jnp.float32),
        "bn_mean":  0.1 * jax.random.normal(ks[4], (C2,), jnp.float32),
        "bn_var":   jnp.abs(jax.random.normal(ks[5], (C2,), jnp.float32)) + 0.5,
        "fc_w":     0.1 * jax.random.normal(ks[6], (9, C2 * 9), jnp.float32),
        "fc_b":     0.1 * jax.random.normal(ks[7], (9,), jnp.float32),
    }
    x = jax.random.normal(ks[8], (B, C, 3, 3), jnp.float32)

    # Parameter folding hoisted out of the per-call path (done once).
    folded = prepare_policy_head_params(params)

    out = jax.block_until_ready(policy_head_forward(x, folded))
    ref = jax.block_until_ready(policy_head_reference(x, params))

    assert out.shape == (B, 3, 3)
    # bf16 matmul operands (f32 accumulation) -> compare with bf16-appropriate
    # tolerance against the f32 reference; softmax normalization itself is exact.
    assert jnp.allclose(out, ref, atol=5e-3, rtol=1e-2), "mismatch vs reference"
    print("KERNEL_OK")
</pallas_src>

<mosaic_0001>
module attributes {stable_mosaic.version = 11 : i64} {
  func.func @policy_head_kernel(%arg0: i32, %arg1: memref<2x36xbf16, #tpu.memory_space<vmem>>, %arg2: memref<36x72xbf16, #tpu.memory_space<vmem>>, %arg3: memref<1x72xf32, #tpu.memory_space<vmem>>, %arg4: memref<72x9xbf16, #tpu.memory_space<vmem>>, %arg5: memref<1x9xf32, #tpu.memory_space<vmem>>, %arg6: memref<2x9xf32, #tpu.memory_space<vmem>>) attributes {dimension_semantics = [#tpu.dimension_semantics<parallel>], iteration_bounds = array<i64: 1>, scalar_prefetch = 0 : i64, scratch_operands = 0 : i64, tpu.core_type = #tpu.core_type<tc>, window_params = [{transform_indices = @transform_0, window_bounds = array<i64: 2, 36>}, {pipeline_mode = #tpu.pipeline_mode<synchronous>, transform_indices = @transform_1, window_bounds = array<i64: 36, 72>}, {pipeline_mode = #tpu.pipeline_mode<synchronous>, transform_indices = @transform_2, window_bounds = array<i64: 1, 72>}, {pipeline_mode = #tpu.pipeline_mode<synchronous>, transform_indices = @transform_3, window_bounds = array<i64: 72, 9>}, {pipeline_mode = #tpu.pipeline_mode<synchronous>, transform_indices = @transform_4, window_bounds = array<i64: 1, 9>}, {transform_indices = @transform_5, window_bounds = array<i64: 2, 9>}]} {
    %c0 = arith.constant 0 : index
    %c0_0 = arith.constant 0 : index
    %0 = vector.load %arg1[%c0, %c0_0] : memref<2x36xbf16, #tpu.memory_space<vmem>>, vector<2x36xbf16>
    %c0_1 = arith.constant 0 : index
    %c0_2 = arith.constant 0 : index
    %1 = vector.load %arg2[%c0_1, %c0_2] : memref<36x72xbf16, #tpu.memory_space<vmem>>, vector<36x72xbf16>
    %cst = arith.constant dense<0.000000e+00> : vector<2x72xf32>
    %2 = tpu.matmul %0, %1, %cst {dimension_numbers = #tpu.dot_dimension_numbers<[1], [0], [0], [1], [0, 0, 1, 1], [], []>} : vector<2x36xbf16>, vector<36x72xbf16>, vector<2x72xf32> -> vector<2x72xf32>
    %c0_3 = arith.constant 0 : index
    %c0_4 = arith.constant 0 : index
    %3 = vector.load %arg3[%c0_3, %c0_4] : memref<1x72xf32, #tpu.memory_space<vmem>>, vector<1x72xf32>
    %4 = vector.broadcast %3 : vector<1x72xf32> to vector<2x72xf32>
    %5 = arith.addf %2, %4 : vector<2x72xf32>
    %cst_5 = arith.constant 0.000000e+00 : f32
    %6 = vector.broadcast %cst_5 : f32 to vector<2x72xf32>
    %7 = arith.maximumf %5, %6 : vector<2x72xf32>
    %8 = arith.truncf %7 : vector<2x72xf32> to vector<2x72xbf16>
    %c0_6 = arith.constant 0 : index
    %c0_7 = arith.constant 0 : index
    %9 = vector.load %arg4[%c0_6, %c0_7] : memref<72x9xbf16, #tpu.memory_space<vmem>>, vector<72x9xbf16>
    %cst_8 = arith.constant dense<0.000000e+00> : vector<2x9xf32>
    %10 = tpu.matmul %8, %9, %cst_8 {dimension_numbers = #tpu.dot_dimension_numbers<[1], [0], [0], [1], [0, 0, 1, 1], [], []>} : vector<2x72xbf16>, vector<72x9xbf16>, vector<2x9xf32> -> vector<2x9xf32>
    %c0_9 = arith.constant 0 : index
    %c0_10 = arith.constant 0 : index
    %11 = vector.load %arg5[%c0_9, %c0_10] : memref<1x9xf32, #tpu.memory_space<vmem>>, vector<1x9xf32>
    %12 = vector.broadcast %11 : vector<1x9xf32> to vector<2x9xf32>
    %13 = arith.addf %10, %12 : vector<2x9xf32>
    %cst_11 = arith.constant dense<0xFF800000> : vector<2xf32>
    %14 = vector.multi_reduction <maximumf>, %13, %cst_11 [1] : vector<2x9xf32> to vector<2xf32>
    %15 = vector.shape_cast %14 : vector<2xf32> to vector<2x1xf32>
    %16 = vector.broadcast %15 : vector<2x1xf32> to vector<2x9xf32>
    %17 = arith.subf %13, %16 : vector<2x9xf32>
    %18 = math.exp %17 : vector<2x9xf32>
    %cst_12 = arith.constant dense<0.000000e+00> : vector<2xf32>
    %19 = vector.multi_reduction <add>, %18, %cst_12 [1] : vector<2x9xf32> to vector<2xf32>
    %20 = vector.shape_cast %19 : vector<2xf32> to vector<2x1xf32>
    %21 = vector.broadcast %20 : vector<2x1xf32> to vector<2x9xf32>
    %22 = arith.divf %18, %21 : vector<2x9xf32>
    %c0_13 = arith.constant 0 : index
    %c0_14 = arith.constant 0 : index
    %23 = vector.load %arg6[%c0_13, %c0_14] : memref<2x9xf32, #tpu.memory_space<vmem>>, vector<2x9xf32>
    tpu.vector_store %arg6[%c0_13, %c0_14], %22 {strides = array<i32>} : memref<2x9xf32, #tpu.memory_space<vmem>>, vector<2x9xf32>,
    return
  }
  func.func @transform_0(%arg0: i32) -> (i32, i32) {
    %c0_i32 = arith.constant 0 : i32
    %c0_i32_0 = arith.constant 0 : i32
    return %arg0, %c0_i32 : i32, i32
  }
  func.func @transform_1(%arg0: i32) -> (i32, i32) {
    %c0_i32 = arith.constant 0 : i32
    %c0_i32_0 = arith.constant 0 : i32
    %c0_i32_1 = arith.constant 0 : i32
    return %c0_i32, %c0_i32_0 : i32, i32
  }
  func.func @transform_2(%arg0: i32) -> (i32, i32) {
    %c0_i32 = arith.constant 0 : i32
    %c0_i32_0 = arith.constant 0 : i32
    %c0_i32_1 = arith.constant 0 : i32
    return %c0_i32, %c0_i32_0 : i32, i32
  }
  func.func @transform_3(%arg0: i32) -> (i32, i32) {
    %c0_i32 = arith.constant 0 : i32
    %c0_i32_0 = arith.constant 0 : i32
    %c0_i32_1 = arith.constant 0 : i32
    return %c0_i32, %c0_i32_0 : i32, i32
  }
  func.func @transform_4(%arg0: i32) -> (i32, i32) {
    %c0_i32 = arith.constant 0 : i32
    %c0_i32_0 = arith.constant 0 : i32
    %c0_i32_1 = arith.constant 0 : i32
    return %c0_i32, %c0_i32_0 : i32, i32
  }
  func.func @transform_5(%arg0: i32) -> (i32, i32) {
    %c0_i32 = arith.constant 0 : i32
    %c0_i32_0 = arith.constant 0 : i32
    return %arg0, %c0_i32 : i32, i32
  }
}

</mosaic_0001>

<llo_original>
// kernel: policy_head_forward.1
$region0: #{policy_head_forward.1}
  #allocation0 [shape = 'u32[]', space=smem, size = 0x4, offset = 0x4, fixed_abs, tag = 'smem constant byte address 0x4 - core index']
  #allocation1 [shape = 'u32[144,128]{1,0:T(1,128)}', space=vmem, size = 0x12000, scoped, tag = 'internal scratch']
  %s0 = inlined_call_operand.vmem [shape: bf16[2,36], index: 0, kind: input, shape index: {}]
  %s1 = inlined_call_operand.vmem [shape: bf16[36,72], index: 1, kind: input, shape index: {}]
  %s2 = inlined_call_operand.vmem [shape: f32[1,72], index: 2, kind: input, shape index: {}]
  %s3 = inlined_call_operand.vmem [shape: bf16[72,9], index: 3, kind: input, shape index: {}]
  %s4 = inlined_call_operand.vmem [shape: f32[1,9], index: 4, kind: input, shape index: {}]
  %s5 = inlined_call_operand.vmem [shape: f32[2,9], index: 5, kind: output, shape index: {}]
  %s6 = sld [smem:[#allocation0]]
  $region30: #{policy_head_forward.1} parent=0
    _
  %s8 = ssub.s32 1, %s6
  %s9 = scalar_select 0, %s8, %s6
  // Predicated region
  $region2: #{policy_head_forward.1} parent=0 // pred_check
    _
  $region3: #{policy_head_forward.1} parent=0 // pred_check_branch
    %11 = sbr.rel (0) target = $region5
  $region4: #{policy_head_forward.1} parent=0 // pred_region
    _
  $region5: #{policy_head_forward.1} parent=0 // pred_fallthru
    _
  // Predicated region
  $region6: #{policy_head_forward.1} parent=0 // pred_check
    _
  $region7: #{policy_head_forward.1} parent=0 // pred_check_branch
    %13 = sbr.rel (0) target = $region9
  $region8: #{policy_head_forward.1} parent=0 // pred_region
    _
  $region9: #{policy_head_forward.1} parent=0 // pred_fallthru
    _
  // Predicated region
  $region10: #{policy_head_forward.1} parent=0 // pred_check
    _
  $region11: #{policy_head_forward.1} parent=0 // pred_check_branch
    %15 = sbr.rel (0) target = $region13
  $region12: #{policy_head_forward.1} parent=0 // pred_region
    _
  $region13: #{policy_head_forward.1} parent=0 // pred_fallthru
    _
  // Predicated region
  $region14: #{policy_head_forward.1} parent=0 // pred_check
    _
  $region15: #{policy_head_forward.1} parent=0 // pred_check_branch
    %17 = sbr.rel (0) target = $region17
  $region16: #{policy_head_forward.1} parent=0 // pred_region
    _
  $region17: #{policy_head_forward.1} parent=0 // pred_fallthru
    _
  // Predicated region
  $region18: #{policy_head_forward.1} parent=0 // pred_check
    _
  $region19: #{policy_head_forward.1} parent=0 // pred_check_branch
    %19 = sbr.rel (0) target = $region21
  $region20: #{policy_head_forward.1} parent=0 // pred_region
    _
  $region21: #{policy_head_forward.1} parent=0 // pred_fallthru
    _
  %v21 = vld [vmem:[%s0] sm:$0x1]
  %v22 = vld [vmem:[%s1] sm:$0xf]
  %v23 = vld [vmem:[%s1 + $0x4] sm:$0xf]
  %v24 = vld [vmem:[%s1 + $0x8] sm:$0xf]
  %v25 = vld [vmem:[%s1 + $0xc] sm:$0xf]
  %v26 = vld [vmem:[%s1 + $0x10] sm:$0x3]
  %v27 = vld [vmem:[%s2] sm:$0x1]
  %v29 = vlaneseq
  %v30 = vshrl.u32 %v29, 7
  %v31 = vsub.s32 0, %v30
  %v32 = vrot.slane %v27, %v31
  %v39 = vunpack.c.l.b16 %v22
  %v40 = vunpack.c.l.b16 %v23
  %v41 = vunpack.c.l.b16 %v24
  %v42 = vunpack.c.l.b16 %v25
  %v43 = vunpack.c.l.b16 %v26
  %v44 = vpack.c.b16 %v40, %v39
  %v45 = vpack.c.b16 %v42, %v41
  %v46 = vpack.c.b16 %v43, %v43
  %vm49 = vcmask 293888
  %v51 = vsel %vm49, %v21, 0
  %vm53 = vcmask 1041408
  %v55 = vsel %vm53, %v46, 0
  %57 = vmatprep.subr.bf16.mxu0 0
  %58 = vmatpush1.bf16.msra.mxu0 %v44
  %59 = vmatprep.subr.bf16.mxu0 0
  %60 = vmatpush1.bf16.msra.mxu0 %v45
  %61 = vmatprep.subr.bf16.mxu0 0
  %62 = vmatpush1.bf16.msra.mxu0 %v55
  %63 = vmatprep.subr.bf16.mxu0 0
  %64 = vmatpush1.bf16.msra.mxu0 0
  %65 = vmatprep.subr.bf16.mxu0 0
  %66 = vmatpush1.bf16.msra.mxu0 0
  %67 = vmatprep.subr.bf16.mxu0 0
  %68 = vmatpush1.bf16.msra.mxu0 0
  %69 = vmatprep.subr.bf16.mxu0 0
  %70 = vmatpush1.bf16.msra.mxu0 0
  %71 = vmatprep.subr.bf16.mxu0 0
  %72 = vmatpush1.bf16.msra.mxu0 0
  %73 = vmatprep.subr.bf16.mxu0 0
  %74 = vmatpush1.bf16.msra.mxu0 0
  %75 = vmatprep.subr.bf16.mxu0 0
  %76 = vmatpush1.bf16.msra.mxu0 0
  %77 = vmatprep.subr.bf16.mxu0 0
  %78 = vmatpush1.bf16.msra.mxu0 0
  %79 = vmatprep.subr.bf16.mxu0 0
  %80 = vmatpush1.bf16.msra.mxu0 0
  %81 = vmatprep.subr.bf16.mxu0 0
  %82 = vmatpush1.bf16.msra.mxu0 0
  %83 = vmatprep.subr.bf16.mxu0 0
  %84 = vmatpush1.bf16.msra.mxu0 0
  %85 = vmatprep.subr.bf16.mxu0 0
  %86 = vmatpush1.bf16.msra.mxu0 0
  %87 = vmatprep.subr.bf16.mxu0 0
  %88 = vmatpush1.bf16.msra.mxu0 0
  %89 = vmatprep.mubr.bf16.mxu0 0
  %90 = vmatmul.mubr.bf16.gmra.mrb[0].mxu0 %v51
  %v91 = vpop.f32.mrb[0].mxu0
  %v92 = vadd.f32 %v32, %v91
  %v93 = vpop.f32.mrb[0].mxu0
  %v94 = vpop.f32.mrb[0].mxu0
  %v95 = vpop.f32.mrb[0].mxu0
  %96 = vdwg.mxu0
  %v97 = vmax.f32 %v92, 0.0
  %v98 = vpack.c.bf16 %v97, %v97
  %v99 = vld [vmem:[%s3] sm:$0xf]
  %v100 = vld [vmem:[%s3 + $0x4] sm:$0xf]
  %v101 = vld [vmem:[%s3 + $0x8] sm:$0xf]
  %v102 = vld [vmem:[%s3 + $0xc] sm:$0xf]
  %v103 = vld [vmem:[%s3 + $0x10] sm:$0xf]
  %v104 = vld [vmem:[%s3 + $0x14] sm:$0xf]
  %v105 = vld [vmem:[%s3 + $0x18] sm:$0xf]
  %v106 = vld [vmem:[%s3 + $0x1c] sm:$0xf]
  %v107 = vld [vmem:[%s3 + $0x20] sm:$0xf]
  %v108 = vld [vmem:[%s4] sm:$0x1]
  %v110 = vlaneseq
  %v111 = vshrl.u32 %v110, 7
  %v112 = vsub.s32 0, %v111
  %v113 = vrot.slane %v108, %v112
  %v124 = vunpack.c.l.b16 %v99
  %v125 = vunpack.c.l.b16 %v100
  %v126 = vunpack.c.l.b16 %v101
  %v127 = vunpack.c.l.b16 %v102
  %v128 = vunpack.c.l.b16 %v103
  %v129 = vunpack.c.l.b16 %v104
  %v130 = vunpack.c.l.b16 %v105
  %v131 = vunpack.c.l.b16 %v106
  %v132 = vunpack.c.l.b16 %v107
  %v133 = vpack.c.b16 %v125, %v124
  %v134 = vpack.c.b16 %v127, %v126
  %v135 = vpack.c.b16 %v129, %v128
  %v136 = vpack.c.b16 %v131, %v130
  %v137 = vpack.c.b16 %v132, %v132
  %vm142 = vcmask 588800
  %v144 = vsel %vm142, %v98, 0
  %vm146 = vcmask 1043456
  %v148 = vsel %vm146, %v137, 0
  %150 = vmatprep.subr.bf16.mxu0 0
  %151 = vmatpush1.bf16.msra.mxu0 %v133
  %152 = vmatprep.subr.bf16.mxu0 0
  %153 = vmatpush1.bf16.msra.mxu0 %v134
  %154 = vmatprep.subr.bf16.mxu0 0
  %155 = vmatpush1.bf16.msra.mxu0 %v135
  %156 = vmatprep.subr.bf16.mxu0 0
  %157 = vmatpush1.bf16.msra.mxu0 %v136
  %158 = vmatprep.subr.bf16.mxu0 0
  %159 = vmatpush1.bf16.msra.mxu0 %v148
  %160 = vmatprep.subr.bf16.mxu0 0
  %161 = vmatpush1.bf16.msra.mxu0 0
  %162 = vmatprep.subr.bf16.mxu0 0
  %163 = vmatpush1.bf16.msra.mxu0 0
  %164 = vmatprep.subr.bf16.mxu0 0
  %165 = vmatpush1.bf16.msra.mxu0 0
  %166 = vmatprep.subr.bf16.mxu0 0
  %167 = vmatpush1.bf16.msra.mxu0 0
  %168 = vmatprep.subr.bf16.mxu0 0
  %169 = vmatpush1.bf16.msra.mxu0 0
  %170 = vmatprep.subr.bf16.mxu0 0
  %171 = vmatpush1.bf16.msra.mxu0 0
  %172 = vmatprep.subr.bf16.mxu0 0
  %173 = vmatpush1.bf16.msra.mxu0 0
  %174 = vmatprep.subr.bf16.mxu0 0
  %175 = vmatpush1.bf16.msra.mxu0 0
  %176 = vmatprep.subr.bf16.mxu0 0
  %177 = vmatpush1.bf16.msra.mxu0 0
  %178 = vmatprep.subr.bf16.mxu0 0
  %179 = vmatpush1.bf16.msra.mxu0 0
  %180 = vmatprep.subr.bf16.mxu0 0
  %181 = vmatpush1.bf16.msra.mxu0 0
  %182 = vmatprep.mubr.bf16.mxu0 0
  %183 = vmatmul.mubr.bf16.gmra.mrb[0].mxu0 %v144
  %v184 = vpop.f32.mrb[0].mxu0
  %v185 = vadd.f32 %v113, %v184
  %v186 = vpop.f32.mrb[0].mxu0
  %v187 = vpop.f32.mrb[0].mxu0
  %v188 = vpop.f32.mrb[0].mxu0
  %189 = vdwg.mxu0
  %vm190 = vcmask 66560
  %v191 = vsel %vm190, %v185, -inf
  %192 = vmax.xlane.f32.xlu0 %v191
  %v193 = vpop.xlane.xlu0 %192
  %v194 = vsub.f32 %v185, %v193
  %v195 = vmul.f32 %v194, 1.442695
  %v196 = vpow.pop %v195
  %v197 = vsel %vm190, %v196, 0.0
  %198 = vadd.xlane.f32.xlu0 %v197
  %v199 = vpop.xlane.xlu0 %198
  %v200 = vrcp.pop %v199
  %v201 = vmul.f32 %v196, %v200
  %202 = vst.msk [vmem:[%s5] sm:$0x3] %vm190, %v201
  // Predicated region
  $region22: #{policy_head_forward.1} parent=0 // pred_check
    _
  $region23: #{policy_head_forward.1} parent=0 // pred_check_branch
    %204 = sbr.rel (0) target = $region25
  $region24: #{policy_head_forward.1} parent=0 // pred_region
    _
  $region25: #{policy_head_forward.1} parent=0 // pred_fallthru
    _
  // Predicated region
  $region26: #{policy_head_forward.1} parent=0 // pred_check
    _
  $region27: #{policy_head_forward.1} parent=0 // pred_check_branch
    %206 = sbr.rel (0) target = $region29
  $region28: #{policy_head_forward.1} parent=0 // pred_region
    _
  $region29: #{policy_head_forward.1} parent=0 // pred_fallthru
    _

</llo_original>
